<compile_context>
chip_gen: v6e
topology: v6e:2x2x1
jax: 0.10.0
libtpu: 0.0.40
codegen_flags: <defaults>
</compile_context>

<pallas_src>
import jax
import jax.numpy as jnp
from jax.experimental import pallas as pl
from jax.experimental.pallas import tpu as pltpu

_LANE_CANDIDATES = (1024, 512, 256, 128)  # lane-dense last-dim choices


def _ternary_kernel(thr_ref, x_ref, o_ref):
    """thr_ref: SMEM f32[2] = [left, right]; x_ref/o_ref: VMEM tiles."""
    x = x_ref[...]
    # Cast thresholds to the tile dtype so bf16/f16 tiles are not promoted
    # to f32 for the compares (2x vreg pressure + extra casts otherwise).
    left = thr_ref[0].astype(x.dtype)
    right = thr_ref[1].astype(x.dtype)
    pos = (x >= right).astype(o_ref.dtype)   # +1 where x >= right
    neg = (x < left).astype(o_ref.dtype)     # +1 where x <  left
    o_ref[...] = pos - neg                   # {-1, 0, +1}


def _is_v7x():
    """Best-effort chip detection; falls back to single-TC configuration."""
    try:
        return "v7" in jax.devices()[0].device_kind.lower()
    except Exception:
        return False


def ternary(x, left=-0.25, right=0.25):
    """Ternarize x to {-1, 0, 1}. Works for any shape / float dtype."""
    orig_shape = x.shape
    orig_dtype = x.dtype
    n = x.size
    itemsize = jnp.dtype(orig_dtype).itemsize
    # Minimum legal sublane tile for this dtype: 8 (f32), 16 (bf16), 32 (i8).
    sublane_min = max(8, 32 // itemsize)

    v7x = _is_v7x()
    block_bytes = (8 if v7x else 4) * 1024 * 1024
    vmem_limit = (48 if v7x else 32) * 1024 * 1024

    # --- choose a lane-dense 2-D layout without copying the whole array ---
    lanes = None
    for cand in _LANE_CANDIDATES:
        if n % cand == 0:
            lanes = cand
            break

    x_flat = x.reshape(-1)
    if lanes is None:
        # Rare ragged fallback: pad up to the next multiple of 128 (block
        # bytes stay constant because row_tile scales with lane width).
        lanes = 128
        n_pad = pl.cdiv(n, lanes) * lanes
        x_flat = jnp.pad(x_flat, (0, n_pad - n))
    else:
        n_pad = n

    rows = n_pad // lanes
    x2d = x_flat.reshape(rows, lanes)

    # --- tiling: constant block BYTES regardless of dtype / lane width ---
    row_tile_cap = block_bytes // (lanes * itemsize)   # power of 2, >= 1024

    if rows > row_tile_cap:
        row_tile = row_tile_cap                 # partial last block via cdiv
    elif v7x and rows >= 2 * sublane_min:
        # Would otherwise be a single block: split the parallel axis into
        # >= 2 blocks so both v7x TensorCores stream the array.
        half = pl.cdiv(rows, 2)
        row_tile = pl.cdiv(half, sublane_min) * sublane_min
    else:
        row_tile = rows                          # full extent -> always legal
    grid = (pl.cdiv(rows, row_tile),)

    thr = jnp.array([left, right], dtype=jnp.float32)

    cost = pl.CostEstimate(
        flops=3 * n,                       # two compares + one subtract/elem
        transcendentals=0,
        bytes_accessed=2 * n * itemsize,   # one read + one write
    )

    out2d = pl.pallas_call(
        _ternary_kernel,
        out_shape=jax.ShapeDtypeStruct((rows, lanes), orig_dtype),
        grid_spec=pltpu.PrefetchScalarGridSpec(
            num_scalar_prefetch=0,
            grid=grid,
            in_specs=[
                pl.BlockSpec(memory_space=pltpu.MemorySpace.SMEM),  # thresholds
                pl.BlockSpec((row_tile, lanes), lambda i: (i, 0)),  # x tile
            ],
            out_specs=pl.BlockSpec((row_tile, lanes), lambda i: (i, 0)),
        ),
        compiler_params=pltpu.CompilerParams(
            dimension_semantics=("parallel",),
            vmem_limit_bytes=vmem_limit,
        ),
        cost_estimate=cost,
    )(thr, x2d)

    out_flat = out2d.reshape(-1)
    if n_pad != n:
        out_flat = out_flat[:n]
    return out_flat.reshape(orig_shape)


def ternary_ref(x, left=-0.25, right=0.25):
    """Pure-JAX reference matching the PyTorch forward."""
    neg = x < left
    pos = x >= right
    return jnp.where(pos, 1.0, jnp.where(neg, -1.0, 0.0)).astype(x.dtype)


if __name__ == "__main__":
    key = jax.random.PRNGKey(0)

    # 1) Small NCHW-like activation tensor, values spanning both thresholds.
    x = jax.random.normal(key, (2, 4, 16, 16), dtype=jnp.float32) * 0.5
    y = jax.block_until_ready(ternary(x))
    y_ref = ternary_ref(x)
    assert y.shape == x.shape and y.dtype == x.dtype
    assert jnp.array_equal(y, y_ref), "mismatch vs reference (f32)"

    # 2) bf16 path (dtype-scaled row tile + in-kernel threshold cast).
    xb = x.astype(jnp.bfloat16)
    yb = jax.block_until_ready(ternary(xb))
    assert yb.dtype == jnp.bfloat16
    assert jnp.array_equal(yb, ternary_ref(xb)), "mismatch vs reference (bf16)"

    # 3) Ragged (non-multiple-of-128) shape exercising the pad fallback.
    x2 = jax.random.normal(jax.random.PRNGKey(1), (3, 8, 33, 7), dtype=jnp.float32)
    y2 = jax.block_until_ready(ternary(x2))
    assert jnp.array_equal(y2, ternary_ref(x2)), "mismatch vs reference (ragged)"

    # 4) Multi-block grid with a partial last row-block (clipped writes).
    x3 = jax.random.normal(jax.random.PRNGKey(2), (2056, 1024), dtype=jnp.float32) * 0.4
    y3 = jax.block_until_ready(ternary(x3))
    assert jnp.array_equal(y3, ternary_ref(x3)), "mismatch vs reference (multi-block)"

    print("KERNEL_OK")
</pallas_src>

<mosaic_0001>
module attributes {stable_mosaic.version = 11 : i64} {
  func.func @_ternary_kernel(%arg0: i32, %arg1: memref<2xf32, #tpu.memory_space<smem>>, %arg2: memref<2x1024xf32, #tpu.memory_space<vmem>>, %arg3: memref<2x1024xf32, #tpu.memory_space<vmem>>) attributes {dimension_semantics = [#tpu.dimension_semantics<parallel>], iteration_bounds = array<i64: 1>, scalar_prefetch = 0 : i64, scratch_operands = 0 : i64, tpu.core_type = #tpu.core_type<tc>, window_params = [{transform_indices = @transform_0, window_bounds = array<i64: 2>}, {transform_indices = @transform_1, window_bounds = array<i64: 2, 1024>}, {transform_indices = @transform_2, window_bounds = array<i64: 2, 1024>}]} {
    %c0 = arith.constant 0 : index
    %c0_0 = arith.constant 0 : index
    %0 = vector.load %arg2[%c0, %c0_0] : memref<2x1024xf32, #tpu.memory_space<vmem>>, vector<2x1024xf32>
    %c0_1 = arith.constant 0 : index
    %1 = memref.load %arg1[%c0_1] : memref<2xf32, #tpu.memory_space<smem>>
    %c1 = arith.constant 1 : index
    %2 = memref.load %arg1[%c1] : memref<2xf32, #tpu.memory_space<smem>>
    %3 = vector.broadcast %2 : f32 to vector<2x1024xf32>
    %4 = arith.cmpf oge, %0, %3 : vector<2x1024xf32>
    %5 = arith.extui %4 : vector<2x1024xi1> to vector<2x1024xi32>
    %6 = arith.sitofp %5 : vector<2x1024xi32> to vector<2x1024xf32>
    %7 = vector.broadcast %1 : f32 to vector<2x1024xf32>
    %8 = arith.cmpf olt, %0, %7 : vector<2x1024xf32>
    %9 = arith.extui %8 : vector<2x1024xi1> to vector<2x1024xi32>
    %10 = arith.sitofp %9 : vector<2x1024xi32> to vector<2x1024xf32>
    %11 = arith.subf %6, %10 : vector<2x1024xf32>
    %c0_2 = arith.constant 0 : index
    %c0_3 = arith.constant 0 : index
    %12 = vector.load %arg3[%c0_2, %c0_3] : memref<2x1024xf32, #tpu.memory_space<vmem>>, vector<2x1024xf32>
    tpu.vector_store %arg3[%c0_2, %c0_3], %11 {strides = array<i32>} : memref<2x1024xf32, #tpu.memory_space<vmem>>, vector<2x1024xf32>,
    return
  }
  func.func @transform_0(%arg0: i32) -> i32 {
    %c0_i32 = arith.constant 0 : i32
    %c0_i32_0 = arith.constant 0 : i32
    return %c0_i32 : i32
  }
  func.func @transform_1(%arg0: i32) -> (i32, i32) {
    %c0_i32 = arith.constant 0 : i32
    %c0_i32_0 = arith.constant 0 : i32
    return %arg0, %c0_i32 : i32, i32
  }
  func.func @transform_2(%arg0: i32) -> (i32, i32) {
    %c0_i32 = arith.constant 0 : i32
    %c0_i32_0 = arith.constant 0 : i32
    return %arg0, %c0_i32 : i32, i32
  }
}

</mosaic_0001>

<llo_original>
// kernel: tpu_custom_call.1
$region0: #{tpu_custom_call.1}
  #allocation0 [shape = 'u32[]', space=smem, size = 0x4, offset = 0x4, fixed_abs, tag = 'smem constant byte address 0x4 - core index']
  #allocation1 [shape = 'u32[144,128]{1,0:T(1,128)}', space=vmem, size = 0x12000, scoped, tag = 'internal scratch']
  %s0 = inlined_call_operand.hbm [shape: f32[2], index: 0, kind: input, shape index: {}]
  %s1 = inlined_call_operand.hbm [shape: f32[2,1024], index: 1, kind: input, shape index: {}]
  %s2 = inlined_call_operand.hbm [shape: f32[2,1024], index: 2, kind: output, shape index: {}]
  %s3 = sld [smem:[#allocation0]]
  $region26: #{tpu_custom_call.1} parent=0
    _
  %s5 = ssub.s32 1, %s3
  %s6 = scalar_select 0, %s5, %s3
  $region1: #{tpu_custom_call.1} parent=0
    #allocation2 [shape = 'u8[512]{0}', space=smem, size = 0x200, scoped, tag = 'input window, operand 0, single buffered']
    #allocation3 [shape = 's32[1]{0}', space=sflag, size = 0x4, scoped, tag = 'scoped memory for tpu_custom_call.1']
    #allocation4 [shape = 's32[1]{0}', space=sflag, size = 0x4, scoped, tag = 'scoped memory for tpu_custom_call.1']
    #allocation5 [shape = 's32[1]{0}', space=sflag, size = 0x4, scoped, tag = 'scoped memory for tpu_custom_call.1']
    #allocation6 [shape = 'u8[8192]{0}', space=vmem, size = 0x2000, scoped, tag = 'input window, operand 1, single buffered']
    #allocation7 [shape = 'u8[8192]{0}', space=vmem, size = 0x2000, scoped, tag = 'output window, operand 0, single buffered']
    %7 = vsyncpa [#allocation5], 0
    %8 = vsyncpa [#allocation3], 0
    %9 = vsyncpa [#allocation4], 0
    // Predicated region
    $region2: #{tpu_custom_call.1} parent=1 // pred_check
      _
    $region3: #{tpu_custom_call.1} parent=1 // pred_check_branch
      %11 = sbr.rel (0) target = $region5
    $region4: #{tpu_custom_call.1} parent=1 // pred_region
      %s13 = ssub.s32 16, 16
      %14 = vsyncadd [#allocation5], %s13
      %17 = dma.hbm_to_smem %s0, 16, [#allocation2], [#allocation5]
    $region5: #{tpu_custom_call.1} parent=1 // pred_fallthru
      _
    // Predicated region
    $region6: #{tpu_custom_call.1} parent=1 // pred_check
      _
    $region7: #{tpu_custom_call.1} parent=1 // pred_check_branch
      %19 = sbr.rel (0) target = $region9
    $region8: #{tpu_custom_call.1} parent=1 // pred_region
      %s21 = ssub.s32 256, 256
      %22 = vsyncadd [#allocation3], %s21
      %s24 = sshll.u32 [#allocation6], 4
      %s25 = int_to_ptr.vmem [resolvable:$true] %s24
      %27 = dma.hbm_to_vmem [thread:$0]  %s1, 256, %s25, [#allocation3]
    $region9: #{tpu_custom_call.1} parent=1 // pred_fallthru
      _
    // Predicated region
    $region10: #{tpu_custom_call.1} parent=1 // pred_check
      _
    $region11: #{tpu_custom_call.1} parent=1 // pred_check_branch
      %29 = sbr.rel (0) target = $region13
    $region12: #{tpu_custom_call.1} parent=1 // pred_region
      %30 = dma.done [#allocation5], 16
    $region13: #{tpu_custom_call.1} parent=1 // pred_fallthru
      _
    // Predicated region
    $region14: #{tpu_custom_call.1} parent=1 // pred_check
      _
    $region15: #{tpu_custom_call.1} parent=1 // pred_check_branch
      %32 = sbr.rel (0) target = $region17
    $region16: #{tpu_custom_call.1} parent=1 // pred_region
      %33 = dma.done [#allocation3], 256
    $region17: #{tpu_custom_call.1} parent=1 // pred_fallthru
      _
    %34 = sfence
    %v35 = vld [vmem:[#allocation6] sm:$0xff]
    %v36 = vld [vmem:[#allocation6 + $0x8] sm:$0xff]
    %s37 = sld [smem:[#allocation2]]
    %s38 = sld [smem:[#allocation2 + $0x1]]
    %v39 = vstv %s38
    %vm40 = vcmp.ge.f32.partialorder %v35, %v39
    %vm41 = vcmp.ge.f32.partialorder %v36, %v39
    %v42 = vsel %vm40, 1, 0
    %v43 = vsel %vm41, 1, 0
    %v44 = vcvt.s32.f32 %v42
    %v45 = vcvt.s32.f32 %v43
    %v46 = vstv %s37
    %vm47 = vcmp.lt.f32.partialorder %v35, %v46
    %vm48 = vcmp.lt.f32.partialorder %v36, %v46
    %v49 = vsel %vm47, 1, 0
    %v50 = vsel %vm48, 1, 0
    %v51 = vcvt.s32.f32 %v49
    %v52 = vcvt.s32.f32 %v50
    %v53 = vsub.f32 %v44, %v51
    %v54 = vsub.f32 %v45, %v52
    %55 = vst [vmem:[#allocation7] sm:$0xff] %v53
    %56 = vst [vmem:[#allocation7 + $0x8] sm:$0xff] %v54
    // Predicated region
    $region18: #{tpu_custom_call.1} parent=1 // pred_check
      _
    $region19: #{tpu_custom_call.1} parent=1 // pred_check_branch
      %58 = sbr.rel (0) target = $region21
    $region20: #{tpu_custom_call.1} parent=1 // pred_region
      %s60 = ssub.s32 256, 256
      %61 = vsyncadd [#allocation4], %s60
      %s63 = sshll.u32 [#allocation7], 4
      %s64 = int_to_ptr.vmem [resolvable:$true] %s63
      %66 = dma.vmem_to_hbm [thread:$0]  %s64, 256, %s2, [#allocation4]
    $region21: #{tpu_custom_call.1} parent=1 // pred_fallthru
      _
    // Predicated region
    $region22: #{tpu_custom_call.1} parent=1 // pred_check
      _
    $region23: #{tpu_custom_call.1} parent=1 // pred_check_branch
      %68 = sbr.rel (0) target = $region25
    $region24: #{tpu_custom_call.1} parent=1 // pred_region
      %69 = dma.done [#allocation4], 256
    $region25: #{tpu_custom_call.1} parent=1 // pred_fallthru
      _
    %70 = vsyncpa [#allocation3], 1
    %71 = vsyncpa [#allocation4], 1
    %72 = vsyncpa [#allocation5], 1

</llo_original>
